<compile_context>
chip_gen: v7x
topology: tpu7x:2x2x1
jax: 0.10.0
libtpu: 0.0.40
codegen_flags: <defaults>
</compile_context>

<pallas_src>
import jax
import jax.numpy as jnp
from jax.experimental import pallas as pl
from jax.experimental.pallas import tpu as pltpu

FEATURE_DIM = 4
FEAT_PAD = 8             # feature rows padded to 8 (sublane multiple)
HIDDEN_DIM = 32          # small stand-in for 256 (hidden // 2 = 16)
NUM_SHARED = 6           # shared Linear+ReLU layers
NUM_LAYERS = NUM_SHARED + 1   # + fused actor/critic head
NEG_INF = -1e9


# ---------------------------------------------------------------------------
# Kernel
# ---------------------------------------------------------------------------
def _ppo_kernel(featT_ref, w_ref, b_ref, out_ref):
    """featT_ref : (8, TM)  transposed features (rows 0..2 specs, row 3 mask)
       w_ref     : (7, H, H) transposed, zero-padded weights (slab 6 = heads)
       b_ref     : (H, 7)    zero-padded biases (one column per layer)
       out_ref   : (2, TM)   row 0 = masked logits, row 1 = critic (pre-mean)
    """
    x = featT_ref[...]                                            # (8, TM)

    # Layer 0: (H, 8) x (8, TM) dot — only 8 feature rows were DMA'd.
    w0 = w_ref[0, :, 0:FEAT_PAD]                                  # (H, 8)
    x = jnp.maximum(
        jnp.dot(w0, x, preferred_element_type=jnp.float32) + b_ref[:, 0:1],
        0.0)                                                      # (H, TM)

    # Layers 1..5: uniform padded (H, H) x (H, TM) MXU dots.
    for i in range(1, NUM_SHARED):
        x = jnp.maximum(
            jnp.dot(w_ref[i], x, preferred_element_type=jnp.float32)
            + b_ref[:, i:i + 1], 0.0)

    # Fused actor/critic head (row 0 = actor, row 1 = critic, rest zero-pad).
    h = jnp.dot(w_ref[NUM_SHARED], x,
                preferred_element_type=jnp.float32)               # (H, TM)
    h = h + b_ref[:, NUM_SHARED:NUM_SHARED + 1]

    # masked_fill(mask == 1, -1e9) on the logits row; critic row untouched.
    mask_row = featT_ref[3:4, :]                                  # (1, TM)
    out_ref[0:1, :] = jnp.where(mask_row > 0.5, jnp.float32(NEG_INF), h[0:1, :])
    out_ref[1:2, :] = h[1:2, :]


# ---------------------------------------------------------------------------
# Parameter init / packing
# ---------------------------------------------------------------------------
def init_params(key, feature_dim=FEATURE_DIM, hidden_dim=HIDDEN_DIM):
    """Torch-like nn.Linear init: U[-1/sqrt(fan_in), +1/sqrt(fan_in)]."""
    h2 = hidden_dim // 2
    dims = [(feature_dim, hidden_dim),
            (hidden_dim, hidden_dim),
            (hidden_dim, hidden_dim),
            (hidden_dim, hidden_dim),
            (hidden_dim, h2),
            (h2, h2),
            (h2, 1),    # actor
            (h2, 1)]    # critic
    params = []
    for fan_in, fan_out in dims:
        key, kw, kb = jax.random.split(key, 3)
        bound = 1.0 / (fan_in ** 0.5)
        w = jax.random.uniform(kw, (fan_in, fan_out), jnp.float32, -bound, bound)
        b = jax.random.uniform(kb, (fan_out,), jnp.float32, -bound, bound)
        params.append((w, b))
    return params


def pack_params(params):
    """Pack 8 (w, b) pairs into one transposed weight blob + one bias blob."""
    hidden_dim = params[0][0].shape[1]
    H = hidden_dim
    wT = jnp.zeros((NUM_LAYERS, H, H), jnp.float32)
    bT = jnp.zeros((H, NUM_LAYERS), jnp.float32)

    # Shared layers: layer i computes x <- relu(W_i^T @ x + b_i) in (H, M) layout.
    for i in range(NUM_SHARED):
        w, b = params[i]
        fan_in, fan_out = w.shape
        wT = wT.at[i, :fan_out, :fan_in].set(w.T)
        bT = bT.at[:fan_out, i].set(b)

    # Fused actor/critic head: row 0 = actor, row 1 = critic.
    wa, ba = params[6]
    wc, bc = params[7]
    h2 = wa.shape[0]
    wT = wT.at[NUM_SHARED, 0, :h2].set(wa[:, 0])
    wT = wT.at[NUM_SHARED, 1, :h2].set(wc[:, 0])
    bT = bT.at[0, NUM_SHARED].set(ba[0])
    bT = bT.at[1, NUM_SHARED].set(bc[0])
    return wT, bT


# ---------------------------------------------------------------------------
# Forward wrapper
# ---------------------------------------------------------------------------
def _round_up(x, m):
    return ((x + m - 1) // m) * m


def _pick_row_tile(Mp):
    """Mp is a multiple of 128. Prefer 2 big blocks (one per v7x TensorCore)."""
    if Mp <= 128:
        return Mp
    half = Mp // 2
    if half % 128 == 0 and half <= 4096:
        return half
    for tm in (4096, 2048, 1024, 512, 256, 128):
        if Mp % tm == 0:
            return tm
    return 128


@jax.jit
def simple_ppo_policy(box_specs, mask, packed_w, packed_b):
    """Returns (logits (B, N), value (B,)) matching the PyTorch forward."""
    B, N, _ = box_specs.shape
    M = B * N
    H = packed_w.shape[1]

    # Pad the row dimension to a lane-dense multiple of 128.
    Mp = max(128, _round_up(M, 128))

    # Transposed features: rows 0..2 = box specs, row 3 = mask, rows 4..7 pad.
    feat = jnp.concatenate(
        [box_specs.astype(jnp.float32), mask.astype(jnp.float32)[..., None]],
        axis=-1).reshape(M, FEATURE_DIM)                          # (M, 4)
    featT = jnp.zeros((FEAT_PAD, Mp), jnp.float32).at[:FEATURE_DIM, :M].set(feat.T)

    TM = _pick_row_tile(Mp)
    grid = (Mp // TM,)

    flops = 2 * Mp * (FEAT_PAD * H + (NUM_LAYERS - 1) * H * H)
    bytes_accessed = 4 * (FEAT_PAD * Mp + NUM_LAYERS * H * H
                          + H * NUM_LAYERS + 2 * Mp)

    out = pl.pallas_call(
        _ppo_kernel,
        out_shape=jax.ShapeDtypeStruct((2, Mp), jnp.float32),
        grid=grid,
        in_specs=[
            pl.BlockSpec((FEAT_PAD, TM), lambda i: (0, i)),          # features (tiled on M)
            pl.BlockSpec((NUM_LAYERS, H, H), lambda i: (0, 0, 0)),   # resident weights
            pl.BlockSpec((H, NUM_LAYERS), lambda i: (0, 0)),         # resident biases
        ],
        out_specs=pl.BlockSpec((2, TM), lambda i: (0, i)),
        compiler_params=pltpu.CompilerParams(
            dimension_semantics=("parallel",)),
        cost_estimate=pl.CostEstimate(
            flops=flops, transcendentals=0, bytes_accessed=bytes_accessed),
    )(featT, packed_w, packed_b)

    logits = out[0, :M].reshape(B, N)                             # already masked
    value = out[1, :M].reshape(B, N).mean(axis=1)                 # per-batch mean
    return logits, value


# ---------------------------------------------------------------------------
# Pure-JAX reference (for correctness check)
# ---------------------------------------------------------------------------
def reference_forward(box_specs, mask, params):
    feat = jnp.concatenate(
        [box_specs.astype(jnp.float32), mask.astype(jnp.float32)[..., None]],
        axis=-1)                                                  # (B, N, 4)
    x = feat
    for i in range(NUM_SHARED):
        w, b = params[i]
        x = jnp.maximum(x @ w + b, 0.0)
    wa, ba = params[6]
    wc, bc = params[7]
    logits = (x @ wa + ba)[..., 0]
    logits = jnp.where(mask > 0.5, jnp.float32(NEG_INF), logits)
    value = (x @ wc + bc)[..., 0].mean(axis=1)
    return logits, value


if __name__ == "__main__":
    key = jax.random.PRNGKey(0)
    kp, kb, km = jax.random.split(key, 3)

    B, N = 2, 8
    box_specs = jax.random.normal(kb, (B, N, 3), jnp.float32)
    mask = (jax.random.uniform(km, (B, N)) > 0.5).astype(jnp.float32)

    params = init_params(kp)
    packed_w, packed_b = pack_params(params)

    logits, value = simple_ppo_policy(box_specs, mask, packed_w, packed_b)
    jax.block_until_ready((logits, value))

    ref_logits, ref_value = reference_forward(box_specs, mask, params)
    assert logits.shape == (B, N) and value.shape == (B,)
    assert jnp.allclose(logits, ref_logits, atol=1e-4, rtol=1e-4)
    assert jnp.allclose(value, ref_value, atol=1e-4, rtol=1e-4)
    print("KERNEL_OK")
</pallas_src>

<mosaic_0001>
module attributes {stable_mosaic.version = 11 : i64} {
  func.func @_ppo_kernel(%arg0: i32, %arg1: memref<8x128xf32, #tpu.memory_space<vmem>>, %arg2: memref<7x32x32xf32, #tpu.memory_space<vmem>>, %arg3: memref<32x7xf32, #tpu.memory_space<vmem>>, %arg4: memref<2x128xf32, #tpu.memory_space<vmem>>) attributes {dimension_semantics = [#tpu.dimension_semantics<parallel>], iteration_bounds = array<i64: 1>, scalar_prefetch = 0 : i64, scratch_operands = 0 : i64, tpu.core_type = #tpu.core_type<tc>, window_params = [{transform_indices = @transform_0, window_bounds = array<i64: 8, 128>}, {pipeline_mode = #tpu.pipeline_mode<synchronous>, transform_indices = @transform_1, window_bounds = array<i64: 7, 32, 32>}, {pipeline_mode = #tpu.pipeline_mode<synchronous>, transform_indices = @transform_2, window_bounds = array<i64: 32, 7>}, {transform_indices = @transform_3, window_bounds = array<i64: 2, 128>}]} {
    %c0 = arith.constant 0 : index
    %c0_0 = arith.constant 0 : index
    %0 = vector.load %arg1[%c0, %c0_0] : memref<8x128xf32, #tpu.memory_space<vmem>>, vector<8x128xf32>
    %c0_1 = arith.constant 0 : index
    %c0_2 = arith.constant 0 : index
    %c0_3 = arith.constant 0 : index
    %1 = vector.load %arg2[%c0_1, %c0_2, %c0_3] : memref<7x32x32xf32, #tpu.memory_space<vmem>>, vector<1x32x8xf32>
    %2 = vector.shape_cast %1 : vector<1x32x8xf32> to vector<32x8xf32>
    %cst = arith.constant dense<0.000000e+00> : vector<32x128xf32>
    %3 = tpu.matmul %2, %0, %cst {dimension_numbers = #tpu.dot_dimension_numbers<[1], [0], [0], [1], [0, 0, 1, 1], [], []>} : vector<32x8xf32>, vector<8x128xf32>, vector<32x128xf32> -> vector<32x128xf32>
    %c0_4 = arith.constant 0 : index
    %c0_5 = arith.constant 0 : index
    %4 = vector.load %arg3[%c0_4, %c0_5] : memref<32x7xf32, #tpu.memory_space<vmem>>, vector<32x1xf32>
    %5 = vector.broadcast %4 : vector<32x1xf32> to vector<32x128xf32>
    %6 = arith.addf %3, %5 : vector<32x128xf32>
    %cst_6 = arith.constant 0.000000e+00 : f32
    %7 = vector.broadcast %cst_6 : f32 to vector<32x128xf32>
    %8 = arith.maximumf %6, %7 : vector<32x128xf32>
    %c1 = arith.constant 1 : index
    %c0_7 = arith.constant 0 : index
    %c0_8 = arith.constant 0 : index
    %9 = vector.load %arg2[%c1, %c0_7, %c0_8] : memref<7x32x32xf32, #tpu.memory_space<vmem>>, vector<1x32x32xf32>
    %10 = vector.shape_cast %9 : vector<1x32x32xf32> to vector<32x32xf32>
    %cst_9 = arith.constant dense<0.000000e+00> : vector<32x128xf32>
    %11 = tpu.matmul %10, %8, %cst_9 {dimension_numbers = #tpu.dot_dimension_numbers<[1], [0], [0], [1], [0, 0, 1, 1], [], []>} : vector<32x32xf32>, vector<32x128xf32>, vector<32x128xf32> -> vector<32x128xf32>
    %c0_10 = arith.constant 0 : index
    %c1_11 = arith.constant 1 : index
    %12 = vector.load %arg3[%c0_10, %c1_11] : memref<32x7xf32, #tpu.memory_space<vmem>>, vector<32x1xf32>
    %13 = vector.broadcast %12 : vector<32x1xf32> to vector<32x128xf32>
    %14 = arith.addf %11, %13 : vector<32x128xf32>
    %cst_12 = arith.constant 0.000000e+00 : f32
    %15 = vector.broadcast %cst_12 : f32 to vector<32x128xf32>
    %16 = arith.maximumf %14, %15 : vector<32x128xf32>
    %c2 = arith.constant 2 : index
    %c0_13 = arith.constant 0 : index
    %c0_14 = arith.constant 0 : index
    %17 = vector.load %arg2[%c2, %c0_13, %c0_14] : memref<7x32x32xf32, #tpu.memory_space<vmem>>, vector<1x32x32xf32>
    %18 = vector.shape_cast %17 : vector<1x32x32xf32> to vector<32x32xf32>
    %cst_15 = arith.constant dense<0.000000e+00> : vector<32x128xf32>
    %19 = tpu.matmul %18, %16, %cst_15 {dimension_numbers = #tpu.dot_dimension_numbers<[1], [0], [0], [1], [0, 0, 1, 1], [], []>} : vector<32x32xf32>, vector<32x128xf32>, vector<32x128xf32> -> vector<32x128xf32>
    %c0_16 = arith.constant 0 : index
    %c2_17 = arith.constant 2 : index
    %20 = vector.load %arg3[%c0_16, %c2_17] : memref<32x7xf32, #tpu.memory_space<vmem>>, vector<32x1xf32>
    %21 = vector.broadcast %20 : vector<32x1xf32> to vector<32x128xf32>
    %22 = arith.addf %19, %21 : vector<32x128xf32>
    %cst_18 = arith.constant 0.000000e+00 : f32
    %23 = vector.broadcast %cst_18 : f32 to vector<32x128xf32>
    %24 = arith.maximumf %22, %23 : vector<32x128xf32>
    %c3 = arith.constant 3 : index
    %c0_19 = arith.constant 0 : index
    %c0_20 = arith.constant 0 : index
    %25 = vector.load %arg2[%c3, %c0_19, %c0_20] : memref<7x32x32xf32, #tpu.memory_space<vmem>>, vector<1x32x32xf32>
    %26 = vector.shape_cast %25 : vector<1x32x32xf32> to vector<32x32xf32>
    %cst_21 = arith.constant dense<0.000000e+00> : vector<32x128xf32>
    %27 = tpu.matmul %26, %24, %cst_21 {dimension_numbers = #tpu.dot_dimension_numbers<[1], [0], [0], [1], [0, 0, 1, 1], [], []>} : vector<32x32xf32>, vector<32x128xf32>, vector<32x128xf32> -> vector<32x128xf32>
    %c0_22 = arith.constant 0 : index
    %c3_23 = arith.constant 3 : index
    %28 = vector.load %arg3[%c0_22, %c3_23] : memref<32x7xf32, #tpu.memory_space<vmem>>, vector<32x1xf32>
    %29 = vector.broadcast %28 : vector<32x1xf32> to vector<32x128xf32>
    %30 = arith.addf %27, %29 : vector<32x128xf32>
    %cst_24 = arith.constant 0.000000e+00 : f32
    %31 = vector.broadcast %cst_24 : f32 to vector<32x128xf32>
    %32 = arith.maximumf %30, %31 : vector<32x128xf32>
    %c4 = arith.constant 4 : index
    %c0_25 = arith.constant 0 : index
    %c0_26 = arith.constant 0 : index
    %33 = vector.load %arg2[%c4, %c0_25, %c0_26] : memref<7x32x32xf32, #tpu.memory_space<vmem>>, vector<1x32x32xf32>
    %34 = vector.shape_cast %33 : vector<1x32x32xf32> to vector<32x32xf32>
    %cst_27 = arith.constant dense<0.000000e+00> : vector<32x128xf32>
    %35 = tpu.matmul %34, %32, %cst_27 {dimension_numbers = #tpu.dot_dimension_numbers<[1], [0], [0], [1], [0, 0, 1, 1], [], []>} : vector<32x32xf32>, vector<32x128xf32>, vector<32x128xf32> -> vector<32x128xf32>
    %c0_28 = arith.constant 0 : index
    %c4_29 = arith.constant 4 : index
    %36 = vector.load %arg3[%c0_28, %c4_29] : memref<32x7xf32, #tpu.memory_space<vmem>>, vector<32x1xf32>
    %37 = vector.broadcast %36 : vector<32x1xf32> to vector<32x128xf32>
    %38 = arith.addf %35, %37 : vector<32x128xf32>
    %cst_30 = arith.constant 0.000000e+00 : f32
    %39 = vector.broadcast %cst_30 : f32 to vector<32x128xf32>
    %40 = arith.maximumf %38, %39 : vector<32x128xf32>
    %c5 = arith.constant 5 : index
    %c0_31 = arith.constant 0 : index
    %c0_32 = arith.constant 0 : index
    %41 = vector.load %arg2[%c5, %c0_31, %c0_32] : memref<7x32x32xf32, #tpu.memory_space<vmem>>, vector<1x32x32xf32>
    %42 = vector.shape_cast %41 : vector<1x32x32xf32> to vector<32x32xf32>
    %cst_33 = arith.constant dense<0.000000e+00> : vector<32x128xf32>
    %43 = tpu.matmul %42, %40, %cst_33 {dimension_numbers = #tpu.dot_dimension_numbers<[1], [0], [0], [1], [0, 0, 1, 1], [], []>} : vector<32x32xf32>, vector<32x128xf32>, vector<32x128xf32> -> vector<32x128xf32>
    %c0_34 = arith.constant 0 : index
    %c5_35 = arith.constant 5 : index
    %44 = vector.load %arg3[%c0_34, %c5_35] : memref<32x7xf32, #tpu.memory_space<vmem>>, vector<32x1xf32>
    %45 = vector.broadcast %44 : vector<32x1xf32> to vector<32x128xf32>
    %46 = arith.addf %43, %45 : vector<32x128xf32>
    %cst_36 = arith.constant 0.000000e+00 : f32
    %47 = vector.broadcast %cst_36 : f32 to vector<32x128xf32>
    %48 = arith.maximumf %46, %47 : vector<32x128xf32>
    %c6 = arith.constant 6 : index
    %c0_37 = arith.constant 0 : index
    %c0_38 = arith.constant 0 : index
    %49 = vector.load %arg2[%c6, %c0_37, %c0_38] : memref<7x32x32xf32, #tpu.memory_space<vmem>>, vector<1x32x32xf32>
    %50 = vector.shape_cast %49 : vector<1x32x32xf32> to vector<32x32xf32>
    %cst_39 = arith.constant dense<0.000000e+00> : vector<32x128xf32>
    %51 = tpu.matmul %50, %48, %cst_39 {dimension_numbers = #tpu.dot_dimension_numbers<[1], [0], [0], [1], [0, 0, 1, 1], [], []>} : vector<32x32xf32>, vector<32x128xf32>, vector<32x128xf32> -> vector<32x128xf32>
    %c0_40 = arith.constant 0 : index
    %c6_41 = arith.constant 6 : index
    %52 = vector.load %arg3[%c0_40, %c6_41] : memref<32x7xf32, #tpu.memory_space<vmem>>, vector<32x1xf32>
    %53 = vector.broadcast %52 : vector<32x1xf32> to vector<32x128xf32>
    %54 = arith.addf %51, %53 : vector<32x128xf32>
    %c3_42 = arith.constant 3 : index
    %c0_43 = arith.constant 0 : index
    %55 = vector.load %arg1[%c3_42, %c0_43] : memref<8x128xf32, #tpu.memory_space<vmem>>, vector<1x128xf32>
    %cst_44 = arith.constant 5.000000e-01 : f32
    %56 = vector.broadcast %cst_44 : f32 to vector<1x128xf32>
    %57 = arith.cmpf ogt, %55, %56 : vector<1x128xf32>
    %58 = vector.extract_strided_slice %54 {offsets = [0, 0], sizes = [1, 128], strides = [1, 1]} : vector<32x128xf32> to vector<1x128xf32>
    %cst_45 = arith.constant -1.000000e+09 : f32
    %59 = vector.broadcast %cst_45 : f32 to vector<1x128xf32>
    %60 = arith.select %57, %59, %58 : vector<1x128xi1>, vector<1x128xf32>
    %c0_46 = arith.constant 0 : index
    %c0_47 = arith.constant 0 : index
    %61 = vector.load %arg4[%c0_46, %c0_47] : memref<2x128xf32, #tpu.memory_space<vmem>>, vector<1x128xf32>
    tpu.vector_store %arg4[%c0_46, %c0_47], %60 {strides = array<i32>} : memref<2x128xf32, #tpu.memory_space<vmem>>, vector<1x128xf32>,
    %62 = vector.extract_strided_slice %54 {offsets = [1, 0], sizes = [1, 128], strides = [1, 1]} : vector<32x128xf32> to vector<1x128xf32>
    %c1_48 = arith.constant 1 : index
    %c0_49 = arith.constant 0 : index
    %63 = vector.load %arg4[%c1_48, %c0_49] : memref<2x128xf32, #tpu.memory_space<vmem>>, vector<1x128xf32>
    tpu.vector_store %arg4[%c1_48, %c0_49], %62 {strides = array<i32>} : memref<2x128xf32, #tpu.memory_space<vmem>>, vector<1x128xf32>,
    return
  }
  func.func @transform_0(%arg0: i32) -> (i32, i32) {
    %c0_i32 = arith.constant 0 : i32
    %c0_i32_0 = arith.constant 0 : i32
    return %c0_i32, %arg0 : i32, i32
  }
  func.func @transform_1(%arg0: i32) -> (i32, i32, i32) {
    %c0_i32 = arith.constant 0 : i32
    %c0_i32_0 = arith.constant 0 : i32
    %c0_i32_1 = arith.constant 0 : i32
    %c0_i32_2 = arith.constant 0 : i32
    return %c0_i32, %c0_i32_0, %c0_i32_1 : i32, i32, i32
  }
  func.func @transform_2(%arg0: i32) -> (i32, i32) {
    %c0_i32 = arith.constant 0 : i32
    %c0_i32_0 = arith.constant 0 : i32
    %c0_i32_1 = arith.constant 0 : i32
    return %c0_i32, %c0_i32_0 : i32, i32
  }
  func.func @transform_3(%arg0: i32) -> (i32, i32) {
    %c0_i32 = arith.constant 0 : i32
    %c0_i32_0 = arith.constant 0 : i32
    return %c0_i32, %arg0 : i32, i32
  }
}

</mosaic_0001>

<llo_original>
// kernel: squeeze.3
$region0: #{squeeze.3}
  %s0 = inlined_call_operand.vmem [shape: f32[16], index: 0, kind: input, shape index: {}]
  %s1 = inlined_call_operand.vmem [shape: f32[2,8], index: 1, kind: output, shape index: {}]
  $region1: #{squeeze.3} parent=0
    #allocation0 [shape = 'u8[4096]{0}', space=vmem, size = 0x1000, scoped, tag = 'scoped mem for output reshape']
    #allocation1 [shape = 'u8[4096]{0}', space=vmem, size = 0x1000, scoped, tag = 'scoped mem for input reshape']
    %s3 = sshllo.u32 0, 1
    %v4 = vld [vmem:[%s0] sm:%s3]
    %5 = vst [vmem:[#allocation1] sm:%s3] %v4
    %v6 = vld [vmem:[#allocation1] sm:$0x1]
    %vm7 = vcmask 64512
    %8 = vst.msk [vmem:[#allocation0] sm:$0x1] %vm7, %v6
    %v9 = vld [vmem:[#allocation1] sm:$0x1]
    %10 = vrot.lane.b32.xlu0 %v9, 120
    %v11 = vpop.permute.xlu0 %10
    %vm12 = vcmask 64512
    %s13 = scalar_lea.vmem [#allocation0], 1
    %14 = vst.msk [vmem:[%s13] sm:$0x1] %vm12, %v11
    %s16 = sshllo.u32 0, 2
    %v18 = vld [vmem:[#allocation0] sm:%s16]
    %s19 = sshllo.u32 0, 2
    %20 = vst [vmem:[%s1] sm:%s19] %v18

// kernel: squeeze.2
$region0: #{squeeze.2}
  %s0 = inlined_call_operand.vmem [shape: f32[16], index: 0, kind: input, shape index: {}]
  %s1 = inlined_call_operand.hbm [shape: f32[2,8], index: 1, kind: output, shape index: {}]
  $region1: #{squeeze.2} parent=0
    #allocation0 [shape = 'u8[1024]{0}', space=vmem, size = 0x400, scoped, tag = 'operand span for operand 1']
    #allocation1 [shape = 's32[1]{0}', space=sflag, size = 0x4, scoped, tag = 'scoped memory for squeeze.2']
    #allocation2 [shape = 'u8[4096]{0}', space=vmem, size = 0x1000, scoped, tag = 'scoped mem for output reshape']
    #allocation3 [shape = 'u8[4096]{0}', space=vmem, size = 0x1000, scoped, tag = 'scoped mem for input reshape']
    %2 = vsyncpa [#allocation1], 0
    %s4 = sshllo.u32 0, 1
    %v5 = vld [vmem:[%s0] sm:%s4]
    %6 = vst [vmem:[#allocation3] sm:%s4] %v5
    %v7 = vld [vmem:[#allocation3] sm:$0x1]
    %vm8 = vcmask 64512
    %9 = vst.msk [vmem:[#allocation2] sm:$0x1] %vm8, %v7
    %v10 = vld [vmem:[#allocation3] sm:$0x1]
    %11 = vrot.lane.b32.xlu0 %v10, 120
    %v12 = vpop.permute.xlu0 %11
    %vm13 = vcmask 64512
    %s14 = scalar_lea.vmem [#allocation2], 1
    %15 = vst.msk [vmem:[%s14] sm:$0x1] %vm13, %v12
    %s17 = sshllo.u32 0, 2
    %v19 = vld [vmem:[#allocation2] sm:%s17]
    %s20 = sshllo.u32 0, 2
    %21 = vst [vmem:[#allocation0] sm:%s20] %v19
    %s23 = ssub.s32 32, 32
    %24 = vsyncadd [#allocation1], %s23
    %s26 = sshll.u32 [#allocation0], 4
    %s27 = int_to_ptr.vmem [resolvable:$true] %s26
    %29 = dma.vmem_to_hbm [thread:$0]  %s27, 32, %s1, [#allocation1]
    %30 = dma.done [#allocation1], 32
    %31 = vsyncpa [#allocation1], 1

// kernel: simple_ppo_policy.1
$region0: #{simple_ppo_policy.1}
  #allocation0 [shape = 'u32[]', space=smem, size = 0x4, offset = 0x4, fixed_abs, tag = 'smem constant byte address 0x4 - core index']
  #allocation1 [shape = 'u32[144,128]{1,0:T(1,128)}', space=vmem, size = 0x12000, scoped, tag = 'internal scratch']
  %s0 = inlined_call_operand.vmem [shape: f32[8,128], index: 0, kind: input, shape index: {}]
  %s1 = inlined_call_operand.hbm [shape: f32[7,32,32], index: 1, kind: input, shape index: {}]
  %s2 = inlined_call_operand.vmem [shape: f32[32,7], index: 2, kind: input, shape index: {}]
  %s3 = inlined_call_operand.vmem [shape: f32[2,128], index: 3, kind: output, shape index: {}]
  %s4 = sld [smem:[#allocation0]]
  $region26: #{simple_ppo_policy.1} parent=0
    _
  %s6 = ssub.s32 1, %s4
  %s7 = scalar_select 0, %s6, %s4
  $region1: #{simple_ppo_policy.1} parent=0
    #allocation2 [shape = 'u8[114688]{0}', space=vmem, size = 0x1c000, scoped, tag = 'input window, operand 1, single buffered']
    #allocation3 [shape = 's32[1]{0}', space=sflag, size = 0x4, scoped, tag = 'scoped memory for simple_ppo_policy.1']
    %8 = vsyncpa [#allocation3], 0
    // Predicated region
    $region2: #{simple_ppo_policy.1} parent=1 // pred_check
      _
    $region3: #{simple_ppo_policy.1} parent=1 // pred_check_branch
      %10 = sbr.rel (0) target = $region5
    $region4: #{simple_ppo_policy.1} parent=1 // pred_region
      _
    $region5: #{simple_ppo_policy.1} parent=1 // pred_fallthru
      _
    // Predicated region
    $region6: #{simple_ppo_policy.1} parent=1 // pred_check
      _
    $region7: #{simple_ppo_policy.1} parent=1 // pred_check_branch
      %12 = sbr.rel (0) target = $region9
    $region8: #{simple_ppo_policy.1} parent=1 // pred_region
      %s14 = ssub.s32 3584, 3584
      %15 = vsyncadd [#allocation3], %s14
      %s16 = sshll.u32 [#allocation2], 4
      %s17 = int_to_ptr.vmem [resolvable:$true] %s16
      %22 = dma.hbm_to_vmem [thread:$0]  %s1, 3584, %s17, [#allocation3], 128, 128, 8
    $region9: #{simple_ppo_policy.1} parent=1 // pred_fallthru
      _
    // Predicated region
    $region10: #{simple_ppo_policy.1} parent=1 // pred_check
      _
    $region11: #{simple_ppo_policy.1} parent=1 // pred_check_branch
      %24 = sbr.rel (0) target = $region13
    $region12: #{simple_ppo_policy.1} parent=1 // pred_region
      _
    $region13: #{simple_ppo_policy.1} parent=1 // pred_fallthru
      _
    // Predicated region
    $region14: #{simple_ppo_policy.1} parent=1 // pred_check
      _
    $region15: #{simple_ppo_policy.1} parent=1 // pred_check_branch
      %26 = sbr.rel (0) target = $region17
    $region16: #{simple_ppo_policy.1} parent=1 // pred_region
      %27 = dma.done [#allocation3], 3584
    $region17: #{simple_ppo_policy.1} parent=1 // pred_fallthru
      _
    %v28 = vld [vmem:[%s0] sm:$0xff]
    %v29 = vld [vmem:[#allocation2] sm:$0xff]
    %v30 = vld [vmem:[#allocation2 + $0x8] sm:$0xff]
    %v31 = vld [vmem:[#allocation2 + $0x10] sm:$0xff]
    %v32 = vld [vmem:[#allocation2 + $0x18] sm:$0xff]
    %v33 = vld [vmem:[%s2] sm:$0xff]
    %v34 = vld [vmem:[%s2 + $0x8] sm:$0xff]
    %v35 = vld [vmem:[%s2 + $0x10] sm:$0xff]
    %v36 = vld [vmem:[%s2 + $0x18] sm:$0xff]
    %38 = vset.pattern.permute.xlu0 0
    %39 = vperm.xlu0 %38, %v33
    %v40 = vpop.permute.xlu0 %39
    %43 = vset.pattern.permute.xlu0 0
    %44 = vperm.xlu0 %43, %v34
    %v45 = vpop.permute.xlu0 %44
    %48 = vset.pattern.permute.xlu0 0
    %49 = vperm.xlu0 %48, %v35
    %v50 = vpop.permute.xlu0 %49
    %53 = vset.pattern.permute.xlu0 0
    %54 = vperm.xlu0 %53, %v36
    %v55 = vpop.permute.xlu0 %54
    %vm57 = vcmask 64512
    %v59 = vsel %vm57, %v29, 0
    %v62 = vsel %vm57, %v30, 0
    %v65 = vsel %vm57, %v31, 0
    %v68 = vsel %vm57, %v32, 0
    %70 = vmatprep.subr.mxu0 0.0
    %71 = vmatpush1.msra.mxu0 %v28
    %72 = vmatprep.subr.mxu0 0.0
    %73 = vmatpush1.msra.mxu0 0.0
    %74 = vmatprep.subr.mxu0 0.0
    %75 = vmatpush1.msra.mxu0 0.0
    %76 = vmatprep.subr.mxu0 0.0
    %77 = vmatpush1.msra.mxu0 0.0
    %78 = vmatprep.subr.mxu0 0.0
    %79 = vmatpush1.msra.mxu0 0.0
    %80 = vmatprep.subr.mxu0 0.0
    %81 = vmatpush1.msra.mxu0 0.0
    %82 = vmatprep.subr.mxu0 0.0
    %83 = vmatpush1.msra.mxu0 0.0
    %84 = vmatprep.subr.mxu0 0.0
    %85 = vmatpush1.msra.mxu0 0.0
    %86 = vmatprep.subr.mxu0 0.0
    %87 = vmatpush1.msra.mxu0 0.0
    %88 = vmatprep.subr.mxu0 0.0
    %89 = vmatpush1.msra.mxu0 0.0
    %90 = vmatprep.subr.mxu0 0.0
    %91 = vmatpush1.msra.mxu0 0.0
    %92 = vmatprep.subr.mxu0 0.0
    %93 = vmatpush1.msra.mxu0 0.0
    %94 = vmatprep.subr.mxu0 0.0
    %95 = vmatpush1.msra.mxu0 0.0
    %96 = vmatprep.subr.mxu0 0.0
    %97 = vmatpush1.msra.mxu0 0.0
    %98 = vmatprep.subr.mxu0 0.0
    %99 = vmatpush1.msra.mxu0 0.0
    %100 = vmatprep.subr.mxu0 0.0
    %101 = vmatpush1.msra.mxu0 0.0
    %102 = vmatprep.subr.mxu0 0.0
    %103 = vmatpush1.msra.mxu0 0.0
    %104 = vmatprep.subr.mxu0 0.0
    %105 = vmatpush1.msra.mxu0 0.0
    %106 = vmatprep.subr.mxu0 0.0
    %107 = vmatpush1.msra.mxu0 0.0
    %108 = vmatprep.subr.mxu0 0.0
    %109 = vmatpush1.msra.mxu0 0.0
    %110 = vmatprep.subr.mxu0 0.0
    %111 = vmatpush1.msra.mxu0 0.0
    %112 = vmatprep.subr.mxu0 0.0
    %113 = vmatpush1.msra.mxu0 0.0
    %114 = vmatprep.subr.mxu0 0.0
    %115 = vmatpush1.msra.mxu0 0.0
    %116 = vmatprep.subr.mxu0 0.0
    %117 = vmatpush1.msra.mxu0 0.0
    %118 = vmatprep.subr.mxu0 0.0
    %119 = vmatpush1.msra.mxu0 0.0
    %120 = vmatprep.subr.mxu0 0.0
    %121 = vmatpush1.msra.mxu0 0.0
    %122 = vmatprep.subr.mxu0 0.0
    %123 = vmatpush1.msra.mxu0 0.0
    %124 = vmatprep.subr.mxu0 0.0
    %125 = vmatpush1.msra.mxu0 0.0
    %126 = vmatprep.subr.mxu0 0.0
    %127 = vmatpush1.msra.mxu0 0.0
    %128 = vmatprep.subr.mxu0 0.0
    %129 = vmatpush1.msra.mxu0 0.0
    %130 = vmatprep.subr.mxu0 0.0
    %131 = vmatpush1.msra.mxu0 0.0
    %132 = vmatprep.subr.mxu0 0.0
    %133 = vmatpush1.msra.mxu0 0.0
    %134 = vmatprep.mubr.f32.mxu0 0.0
    %135 = vmatmul.mubr.f32.gmra.mrb[0].mxu0 %v59
    %v136 = vpop.f32.mrb[0].mxu0
    %v137 = vadd.f32 %v40, %v136
    %v138 = vpop.f32.mrb[0].mxu0
    %139 = vmatprep.mubr.f32.mxu0 0.0
    %140 = vmatmul.mubr.f32.gmra.mrb[0].mxu0 %v62
    %v141 = vpop.f32.mrb[0].mxu0
    %v142 = vadd.f32 %v45, %v141
    %v143 = vpop.f32.mrb[0].mxu0
    %144 = vmatprep.mubr.f32.mxu0 0.0
    %145 = vmatmul.mubr.f32.gmra.mrb[0].mxu0 %v65
    %v146 = vpop.f32.mrb[0].mxu0
    %v147 = vadd.f32 %v50, %v146
    %v148 = vpop.f32.mrb[0].mxu0
    %149 = vmatprep.mubr.f32.mxu0 0.0
    %150 = vmatmul.mubr.f32.gmra.mrb[0].mxu0 %v68
    %v151 = vpop.f32.mrb[0].mxu0
    %v152 = vadd.f32 %v55, %v151
    %v153 = vpop.f32.mrb[0].mxu0
    %154 = vdwg.mxu0
    %v155 = vmax.f32 %v137, 0.0
    %v156 = vmax.f32 %v142, 0.0
    %v157 = vmax.f32 %v147, 0.0
    %v158 = vmax.f32 %v152, 0.0
    %s159 = scalar_lea.vmem [#allocation2], 32
    %v160 = vld [vmem:[%s159] sm:$0xff]
    %v161 = vld [vmem:[%s159 + $0x8] sm:$0xff]
    %v162 = vld [vmem:[%s159 + $0x10] sm:$0xff]
    %v163 = vld [vmem:[%s159 + $0x18] sm:$0xff]
    %164 = vset.pattern.permute.xlu0 1
    %165 = vperm.xlu0 %164, %v33
    %v166 = vpop.permute.xlu0 %165
    %168 = vset.pattern.permute.xlu0 1
    %169 = vperm.xlu0 %168, %v34
    %v170 = vpop.permute.xlu0 %169
    %172 = vset.pattern.permute.xlu0 1
    %173 = vperm.xlu0 %172, %v35
    %v174 = vpop.permute.xlu0 %173
    %176 = vset.pattern.permute.xlu0 1
    %177 = vperm.xlu0 %176, %v36
    %v178 = vpop.permute.xlu0 %177
    %vm180 = vcmask 261120
    %v182 = vsel %vm180, %v160, 0
    %v185 = vsel %vm180, %v161, 0
    %v188 = vsel %vm180, %v162, 0
    %v191 = vsel %vm180, %v163, 0
    %193 = vmatprep.subr.mxu0 0.0
    %194 = vmatpush1.msra.mxu0 %v155
    %195 = vmatprep.subr.mxu0 0.0
    %196 = vmatpush1.msra.mxu0 %v156
    %197 = vmatprep.subr.mxu0 0.0
    %198 = vmatpush1.msra.mxu0 %v157
    %199 = vmatprep.subr.mxu0 0.0
    %200 = vmatpush1.msra.mxu0 %v158
    %201 = vmatprep.subr.mxu0 0.0
    %202 = vmatpush1.msra.mxu0 0.0
    %203 = vmatprep.subr.mxu0 0.0
    %204 = vmatpush1.msra.mxu0 0.0
    %205 = vmatprep.subr.mxu0 0.0
    %206 = vmatpush1.msra.mxu0 0.0
    %207 = vmatprep.subr.mxu0 0.0
    %208 = vmatpush1.msra.mxu0 0.0
    %209 = vmatprep.subr.mxu0 0.0
    %210 = vmatpush1.msra.mxu0 0.0
    %211 = vmatprep.subr.mxu0 0.0
    %212 = vmatpush1.msra.mxu0 0.0
    %213 = vmatprep.subr.mxu0 0.0
    %214 = vmatpush1.msra.mxu0 0.0
    %215 = vmatprep.subr.mxu0 0.0
    %216 = vmatpush1.msra.mxu0 0.0
    %217 = vmatprep.subr.mxu0 0.0
    %218 = vmatpush1.msra.mxu0 0.0
    %219 = vmatprep.subr.mxu0 0.0
    %220 = vmatpush1.msra.mxu0 0.0
    %221 = vmatprep.subr.mxu0 0.0
    %222 = vmatpush1.msra.mxu0 0.0
    %223 = vmatprep.subr.mxu0 0.0
    %224 = vmatpush1.msra.mxu0 0.0
    %225 = vmatprep.subr.mxu0 0.0
    %226 = vmatpush1.msra.mxu0 0.0
    %227 = vmatprep.subr.mxu0 0.0
    %228 = vmatpush1.msra.mxu0 0.0
    %229 = vmatprep.subr.mxu0 0.0
    %230 = vmatpush1.msra.mxu0 0.0
    %231 = vmatprep.subr.mxu0 0.0
    %232 = vmatpush1.msra.mxu0 0.0
    %233 = vmatprep.subr.mxu0 0.0
    %234 = vmatpush1.msra.mxu0 0.0
    %235 = vmatprep.subr.mxu0 0.0
    %236 = vmatpush1.msra.mxu0 0.0
    %237 = vmatprep.subr.mxu0 0.0
    %238 = vmatpush1.msra.mxu0 0.0
    %239 = vmatprep.subr.mxu0 0.0
    %240 = vmatpush1.msra.mxu0 0.0
    %241 = vmatprep.subr.mxu0 0.0
    %242 = vmatpush1.msra.mxu0 0.0
    %243 = vmatprep.subr.mxu0 0.0
    %244 = vmatpush1.msra.mxu0 0.0
    %245 = vmatprep.subr.mxu0 0.0
    %246 = vmatpush1.msra.mxu0 0.0
    %247 = vmatprep.subr.mxu0 0.0
    %248 = vmatpush1.msra.mxu0 0.0
    %249 = vmatprep.subr.mxu0 0.0
    %250 = vmatpush1.msra.mxu0 0.0
    %251 = vmatprep.subr.mxu0 0.0
    %252 = vmatpush1.msra.mxu0 0.0
    %253 = vmatprep.subr.mxu0 0.0
    %254 = vmatpush1.msra.mxu0 0.0
    %255 = vmatprep.subr.mxu0 0.0
    %256 = vmatpush1.msra.mxu0 0.0
    %257 = vmatprep.mubr.f32.mxu0 0.0
    %258 = vmatmul.mubr.f32.gmra.mrb[0].mxu0 %v182
    %v259 = vpop.f32.mrb[0].mxu0
    %v260 = vadd.f32 %v166, %v259
    %v261 = vpop.f32.mrb[0].mxu0
    %262 = vmatprep.mubr.f32.mxu0 0.0
    %263 = vmatmul.mubr.f32.gmra.mrb[0].mxu0 %v185
    %v264 = vpop.f32.mrb[0].mxu0
    %v265 = vadd.f32 %v170, %v264
    %v266 = vpop.f32.mrb[0].mxu0
    %267 = vmatprep.mubr.f32.mxu0 0.0
    %268 = vmatmul.mubr.f32.gmra.mrb[0].mxu0 %v188
    %v269 = vpop.f32.mrb[0].mxu0
    %v270 = vadd.f32 %v174, %v269
    %v271 = vpop.f32.mrb[0].mxu0
    %272 = vmatprep.mubr.f32.mxu0 0.0
    %273 = vmatmul.mubr.f32.gmra.mrb[0].mxu0 %v191
    %v274 = vpop.f32.mrb[0].mxu0
    %v275 = vadd.f32 %v178, %v274
    %v276 = vpop.f32.mrb[0].mxu0
    %277 = vdwg.mxu0
    %v278 = vmax.f32 %v260, 0.0
    %v279 = vmax.f32 %v265, 0.0
    %v280 = vmax.f32 %v270, 0.0
    %v281 = vmax.f32 %v275, 0.0
    %s282 = scalar_lea.vmem [#allocation2], 64
    %v283 = vld [vmem:[%s282] sm:$0xff]
    %v284 = vld [vmem:[%s282 + $0x8] sm:$0xff]
    %v285 = vld [vmem:[%s282 + $0x10] sm:$0xff]
    %v286 = vld [vmem:[%s282 + $0x18] sm:$0xff]
    %287 = vset.pattern.permute.xlu0 2
    %288 = vperm.xlu0 %287, %v33
    %v289 = vpop.permute.xlu0 %288
    %291 = vset.pattern.permute.xlu0 2
    %292 = vperm.xlu0 %291, %v34
    %v293 = vpop.permute.xlu0 %292
    %295 = vset.pattern.permute.xlu0 2
    %296 = vperm.xlu0 %295, %v35
    %v297 = vpop.permute.xlu0 %296
    %299 = vset.pattern.permute.xlu0 2
    %300 = vperm.xlu0 %299, %v36
    %v301 = vpop.permute.xlu0 %300
    %v304 = vsel %vm180, %v283, 0
    %v307 = vsel %vm180, %v284, 0
    %v310 = vsel %vm180, %v285, 0
    %v313 = vsel %vm180, %v286, 0
    %315 = vmatprep.subr.mxu0 0.0
    %316 = vmatpush1.msra.mxu0 %v278
    %317 = vmatprep.subr.mxu0 0.0
    %318 = vmatpush1.msra.mxu0 %v279
    %319 = vmatprep.subr.mxu0 0.0
    %320 = vmatpush1.msra.mxu0 %v280
    %321 = vmatprep.subr.mxu0 0.0
    %322 = vmatpush1.msra.mxu0 %v281
    %323 = vmatprep.subr.mxu0 0.0
    %324 = vmatpush1.msra.mxu0 0.0
    %325 = vmatprep.subr.mxu0 0.0
    %326 = vmatpush1.msra.mxu0 0.0
    %327 = vmatprep.subr.mxu0 0.0
    %328 = vmatpush1.msra.mxu0 0.0
    %329 = vmatprep.subr.mxu0 0.0
    %330 = vmatpush1.msra.mxu0 0.0
    %331 = vmatprep.subr.mxu0 0.0
    %332 = vmatpush1.msra.mxu0 0.0
    %333 = vmatprep.subr.mxu0 0.0
    %334 = vmatpush1.msra.mxu0 0.0
    %335 = vmatprep.subr.mxu0 0.0
    %336 = vmatpush1.msra.mxu0 0.0
    %337 = vmatprep.subr.mxu0 0.0
    %338 = vmatpush1.msra.mxu0 0.0
    %339 = vmatprep.subr.mxu0 0.0
    %340 = vmatpush1.msra.mxu0 0.0
    %341 = vmatprep.subr.mxu0 0.0
    %342 = vmatpush1.msra.mxu0 0.0
    %343 = vmatprep.subr.mxu0 0.0
    %344 = vmatpush1.msra.mxu0 0.0
    %345 = vmatprep.subr.mxu0 0.0
    %346 = vmatpush1.msra.mxu0 0.0
    %347 = vmatprep.subr.mxu0 0.0
    %348 = vmatpush1.msra.mxu0 0.0
    %349 = vmatprep.subr.mxu0 0.0
    %350 = vmatpush1.msra.mxu0 0.0
    %351 = vmatprep.subr.mxu0 0.0
    %352 = vmatpush1.msra.mxu0 0.0
    %353 = vmatprep.subr.mxu0 0.0
    %354 = vmatpush1.msra.mxu0 0.0
    %355 = vmatprep.subr.mxu0 0.0
    %356 = vmatpush1.msra.mxu0 0.0
    %357 = vmatprep.subr.mxu0 0.0
    %358 = vmatpush1.msra.mxu0 0.0
    %359 = vmatprep.subr.mxu0 0.0
    %360 = vmatpush1.msra.mxu0 0.0
    %361 = vmatprep.subr.mxu0 0.0
    %362 = vmatpush1.msra.mxu0 0.0
    %363 = vmatprep.subr.mxu0 0.0
    %364 = vmatpush1.msra.mxu0 0.0
    %365 = vmatprep.subr.mxu0 0.0
    %366 = vmatpush1.msra.mxu0 0.0
    %367 = vmatprep.subr.mxu0 0.0
    %368 = vmatpush1.msra.mxu0 0.0
    %369 = vmatprep.subr.mxu0 0.0
    %370 = vmatpush1.msra.mxu0 0.0
    %371 = vmatprep.subr.mxu0 0.0
    %372 = vmatpush1.msra.mxu0 0.0
    %373 = vmatprep.subr.mxu0 0.0
    %374 = vmatpush1.msra.mxu0 0.0
    %375 = vmatprep.subr.mxu0 0.0
    %376 = vmatpush1.msra.mxu0 0.0
    %377 = vmatprep.subr.mxu0 0.0
    %378 = vmatpush1.msra.mxu0 0.0
    %379 = vmatprep.mubr.f32.mxu0 0.0
    %380 = vmatmul.mubr.f32.gmra.mrb[0].mxu0 %v304
    %v381 = vpop.f32.mrb[0].mxu0
    %v382 = vadd.f32 %v289, %v381
    %v383 = vpop.f32.mrb[0].mxu0
    %384 = vmatprep.mubr.f32.mxu0 0.0
    %385 = vmatmul.mubr.f32.gmra.mrb[0].mxu0 %v307
    %v386 = vpop.f32.mrb[0].mxu0
    %v387 = vadd.f32 %v293, %v386
    %v388 = vpop.f32.mrb[0].mxu0
    %389 = vmatprep.mubr.f32.mxu0 0.0
    %390 = vmatmul.mubr.f32.gmra.mrb[0].mxu0 %v310
    %v391 = vpop.f32.mrb[0].mxu0
    %v392 = vadd.f32 %v297, %v391
    %v393 = vpop.f32.mrb[0].mxu0
    %394 = vmatprep.mubr.f32.mxu0 0.0
    %395 = vmatmul.mubr.f32.gmra.mrb[0].mxu0 %v313
    %v396 = vpop.f32.mrb[0].mxu0
    %v397 = vadd.f32 %v301, %v396
    %v398 = vpop.f32.mrb[0].mxu0
    %399 = vdwg.mxu0
    %v400 = vmax.f32 %v382, 0.0
    %v401 = vmax.f32 %v387, 0.0
    %v402 = vmax.f32 %v392, 0.0
    %v403 = vmax.f32 %v397, 0.0
    %s404 = scalar_lea.vmem [#allocation2], 96
    %v405 = vld [vmem:[%s404] sm:$0xff]
    %v406 = vld [vmem:[%s404 + $0x8] sm:$0xff]
    %v407 = vld [vmem:[%s404 + $0x10] sm:$0xff]
    %v408 = vld [vmem:[%s404 + $0x18] sm:$0xff]
    %409 = vset.pattern.permute.xlu0 3
    %410 = vperm.xlu0 %409, %v33
    %v411 = vpop.permute.xlu0 %410
    %413 = vset.pattern.permute.xlu0 3
    %414 = vperm.xlu0 %413, %v34
    %v415 = vpop.permute.xlu0 %414
    %417 = vset.pattern.permute.xlu0 3
    %418 = vperm.xlu0 %417, %v35
    %v419 = vpop.permute.xlu0 %418
    %421 = vset.pattern.permute.xlu0 3
    %422 = vperm.xlu0 %421, %v36
    %v423 = vpop.permute.xlu0 %422
    %v426 = vsel %vm180, %v405, 0
    %v429 = vsel %vm180, %v406, 0
    %v432 = vsel %vm180, %v407, 0
    %v435 = vsel %vm180, %v408, 0
    %437 = vmatprep.subr.mxu0 0.0
    %438 = vmatpush1.msra.mxu0 %v400
    %439 = vmatprep.subr.mxu0 0.0
    %440 = vmatpush1.msra.mxu0 %v401
    %441 = vmatprep.subr.mxu0 0.0
    %442 = vmatpush1.msra.mxu0 %v402
    %443 = vmatprep.subr.mxu0 0.0
    %444 = vmatpush1.msra.mxu0 %v403
    %445 = vmatprep.subr.mxu0 0.0
    %446 = vmatpush1.msra.mxu0 0.0
    %447 = vmatprep.subr.mxu0 0.0
    %448 = vmatpush1.msra.mxu0 0.0
    %449 = vmatprep.subr.mxu0 0.0
    %450 = vmatpush1.msra.mxu0 0.0
    %451 = vmatprep.subr.mxu0 0.0
    %452 = vmatpush1.msra.mxu0 0.0
    %453 = vmatprep.subr.mxu0 0.0
    %454 = vmatpush1.msra.mxu0 0.0
    %455 = vmatprep.subr.mxu0 0.0
    %456 = vmatpush1.msra.mxu0 0.0
    %457 = vmatprep.subr.mxu0 0.0
    %458 = vmatpush1.msra.mxu0 0.0
    %459 = vmatprep.subr.mxu0 0.0
    %460 = vmatpush1.msra.mxu0 0.0
    %461 = vmatprep.subr.mxu0 0.0
    %462 = vmatpush1.msra.mxu0 0.0
    %463 = vmatprep.subr.mxu0 0.0
    %464 = vmatpush1.msra.mxu0 0.0
    %465 = vmatprep.subr.mxu0 0.0
    %466 = vmatpush1.msra.mxu0 0.0
    %467 = vmatprep.subr.mxu0 0.0
    %468 = vmatpush1.msra.mxu0 0.0
    %469 = vmatprep.subr.mxu0 0.0
    %470 = vmatpush1.msra.mxu0 0.0
    %471 = vmatprep.subr.mxu0 0.0
    %472 = vmatpush1.msra.mxu0 0.0
    %473 = vmatprep.subr.mxu0 0.0
    %474 = vmatpush1.msra.mxu0 0.0
    %475 = vmatprep.subr.mxu0 0.0
    %476 = vmatpush1.msra.mxu0 0.0
    %477 = vmatprep.subr.mxu0 0.0
    %478 = vmatpush1.msra.mxu0 0.0
    %479 = vmatprep.subr.mxu0 0.0
    %480 = vmatpush1.msra.mxu0 0.0
    %481 = vmatprep.subr.mxu0 0.0
    %482 = vmatpush1.msra.mxu0 0.0
    %483 = vmatprep.subr.mxu0 0.0
    %484 = vmatpush1.msra.mxu0 0.0
    %485 = vmatprep.subr.mxu0 0.0
    %486 = vmatpush1.msra.mxu0 0.0
    %487 = vmatprep.subr.mxu0 0.0
    %488 = vmatpush1.msra.mxu0 0.0
    %489 = vmatprep.subr.mxu0 0.0
    %490 = vmatpush1.msra.mxu0 0.0
    %491 = vmatprep.subr.mxu0 0.0
    %492 = vmatpush1.msra.mxu0 0.0
    %493 = vmatprep.subr.mxu0 0.0
    %494 = vmatpush1.msra.mxu0 0.0
    %495 = vmatprep.subr.mxu0 0.0
    %496 = vmatpush1.msra.mxu0 0.0
    %497 = vmatprep.subr.mxu0 0.0
    %498 = vmatpush1.msra.mxu0 0.0
    %499 = vmatprep.subr.mxu0 0.0
    %500 = vmatpush1.msra.mxu0 0.0
    %501 = vmatprep.mubr.f32.mxu0 0.0
    %502 = vmatmul.mubr.f32.gmra.mrb[0].mxu0 %v426
    %v503 = vpop.f32.mrb[0].mxu0
    %v504 = vadd.f32 %v411, %v503
    %v505 = vpop.f32.mrb[0].mxu0
    %506 = vmatprep.mubr.f32.mxu0 0.0
    %507 = vmatmul.mubr.f32.gmra.mrb[0].mxu0 %v429
    %v508 = vpop.f32.mrb[0].mxu0
    %v509 = vadd.f32 %v415, %v508
    %v510 = vpop.f32.mrb[0].mxu0
    %511 = vmatprep.mubr.f32.mxu0 0.0
    %512 = vmatmul.mubr.f32.gmra.mrb[0].mxu0 %v432
    %v513 = vpop.f32.mrb[0].mxu0
    %v514 = vadd.f32 %v419, %v513
    %v515 = vpop.f32.mrb[0].mxu0
    %516 = vmatprep.mubr.f32.mxu0 0.0
    %517 = vmatmul.mubr.f32.gmra.mrb[0].mxu0 %v435
    %v518 = vpop.f32.mrb[0].mxu0
    %v519 = vadd.f32 %v423, %v518
    %v520 = vpop.f32.mrb[0].mxu0
    %521 = vdwg.mxu0
    %v522 = vmax.f32 %v504, 0.0
    %v523 = vmax.f32 %v509, 0.0
    %v524 = vmax.f32 %v514, 0.0
    %v525 = vmax.f32 %v519, 0.0
    %s526 = scalar_lea.vmem [#allocation2], 128
    %v527 = vld [vmem:[%s526] sm:$0xff]
    %v528 = vld [vmem:[%s526 + $0x8] sm:$0xff]
    %v529 = vld [vmem:[%s526 + $0x10] sm:$0xff]
    %v530 = vld [vmem:[%s526 + $0x18] sm:$0xff]
    %531 = vset.pattern.permute.xlu0 4
    %532 = vperm.xlu0 %531, %v33
    %v533 = vpop.permute.xlu0 %532
    %535 = vset.pattern.permute.xlu0 4
    %536 = vperm.xlu0 %535, %v34
    %v537 = vpop.permute.xlu0 %536
    %539 = vset.pattern.permute.xlu0 4
    %540 = vperm.xlu0 %539, %v35
    %v541 = vpop.permute.xlu0 %540
    %543 = vset.pattern.permute.xlu0 4
    %544 = vperm.xlu0 %543, %v36
    %v545 = vpop.permute.xlu0 %544
    %v548 = vsel %vm180, %v527, 0
    %v551 = vsel %vm180, %v528, 0
    %v554 = vsel %vm180, %v529, 0
    %v557 = vsel %vm180, %v530, 0
    %559 = vmatprep.subr.mxu0 0.0
    %560 = vmatpush1.msra.mxu0 %v522
    %561 = vmatprep.subr.mxu0 0.0
    %562 = vmatpush1.msra.mxu0 %v523
    %563 = vmatprep.subr.mxu0 0.0
    %564 = vmatpush1.msra.mxu0 %v524
    %565 = vmatprep.subr.mxu0 0.0
    %566 = vmatpush1.msra.mxu0 %v525
    %567 = vmatprep.subr.mxu0 0.0
    %568 = vmatpush1.msra.mxu0 0.0
    %569 = vmatprep.subr.mxu0 0.0
    %570 = vmatpush1.msra.mxu0 0.0
    %571 = vmatprep.subr.mxu0 0.0
    %572 = vmatpush1.msra.mxu0 0.0
    %573 = vmatprep.subr.mxu0 0.0
    %574 = vmatpush1.msra.mxu0 0.0
    %575 = vmatprep.subr.mxu0 0.0
    %576 = vmatpush1.msra.mxu0 0.0
    %577 = vmatprep.subr.mxu0 0.0
    %578 = vmatpush1.msra.mxu0 0.0
    %579 = vmatprep.subr.mxu0 0.0
    %580 = vmatpush1.msra.mxu0 0.0
    %581 = vmatprep.subr.mxu0 0.0
    %582 = vmatpush1.msra.mxu0 0.0
    %583 = vmatprep.subr.mxu0 0.0
    %584 = vmatpush1.msra.mxu0 0.0
    %585 = vmatprep.subr.mxu0 0.0
    %586 = vmatpush1.msra.mxu0 0.0
    %587 = vmatprep.subr.mxu0 0.0
    %588 = vmatpush1.msra.mxu0 0.0
    %589 = vmatprep.subr.mxu0 0.0
    %590 = vmatpush1.msra.mxu0 0.0
    %591 = vmatprep.subr.mxu0 0.0
    %592 = vmatpush1.msra.mxu0 0.0
    %593 = vmatprep.subr.mxu0 0.0
    %594 = vmatpush1.msra.mxu0 0.0
    %595 = vmatprep.subr.mxu0 0.0
    %596 = vmatpush1.msra.mxu0 0.0
    %597 = vmatprep.subr.mxu0 0.0
    %598 = vmatpush1.msra.mxu0 0.0
    %599 = vmatprep.subr.mxu0 0.0
    %600 = vmatpush1.msra.mxu0 0.0
    %601 = vmatprep.subr.mxu0 0.0
    %602 = vmatpush1.msra.mxu0 0.0
    %603 = vmatprep.subr.mxu0 0.0
    %604 = vmatpush1.msra.mxu0 0.0
    %605 = vmatprep.subr.mxu0 0.0
    %606 = vmatpush1.msra.mxu0 0.0
    %607 = vmatprep.subr.mxu0 0.0
    %608 = vmatpush1.msra.mxu0 0.0
    %609 = vmatprep.subr.mxu0 0.0
    %610 = vmatpush1.msra.mxu0 0.0
    %611 = vmatprep.subr.mxu0 0.0
    %612 = vmatpush1.msra.mxu0 0.0
    %613 = vmatprep.subr.mxu0 0.0
    %614 = vmatpush1.msra.mxu0 0.0
    %615 = vmatprep.subr.mxu0 0.0
    %616 = vmatpush1.msra.mxu0 0.0
    %617 = vmatprep.subr.mxu0 0.0
    %618 = vmatpush1.msra.mxu0 0.0
    %619 = vmatprep.subr.mxu0 0.0
    %620 = vmatpush1.msra.mxu0 0.0
    %621 = vmatprep.subr.mxu0 0.0
    %622 = vmatpush1.msra.mxu0 0.0
    %623 = vmatprep.mubr.f32.mxu0 0.0
    %624 = vmatmul.mubr.f32.gmra.mrb[0].mxu0 %v548
    %v625 = vpop.f32.mrb[0].mxu0
    %v626 = vadd.f32 %v533, %v625
    %v627 = vpop.f32.mrb[0].mxu0
    %628 = vmatprep.mubr.f32.mxu0 0.0
    %629 = vmatmul.mubr.f32.gmra.mrb[0].mxu0 %v551
    %v630 = vpop.f32.mrb[0].mxu0
    %v631 = vadd.f32 %v537, %v630
    %v632 = vpop.f32.mrb[0].mxu0
    %633 = vmatprep.mubr.f32.mxu0 0.0
    %634 = vmatmul.mubr.f32.gmra.mrb[0].mxu0 %v554
    %v635 = vpop.f32.mrb[0].mxu0
    %v636 = vadd.f32 %v541, %v635
    %v637 = vpop.f32.mrb[0].mxu0
    %638 = vmatprep.mubr.f32.mxu0 0.0
    %639 = vmatmul.mubr.f32.gmra.mrb[0].mxu0 %v557
    %v640 = vpop.f32.mrb[0].mxu0
    %v641 = vadd.f32 %v545, %v640
    %v642 = vpop.f32.mrb[0].mxu0
    %643 = vdwg.mxu0
    %v644 = vmax.f32 %v626, 0.0
    %v645 = vmax.f32 %v631, 0.0
    %v646 = vmax.f32 %v636, 0.0
    %v647 = vmax.f32 %v641, 0.0
    %s648 = scalar_lea.vmem [#allocation2], 160
    %v649 = vld [vmem:[%s648] sm:$0xff]
    %v650 = vld [vmem:[%s648 + $0x8] sm:$0xff]
    %v651 = vld [vmem:[%s648 + $0x10] sm:$0xff]
    %v652 = vld [vmem:[%s648 + $0x18] sm:$0xff]
    %653 = vset.pattern.permute.xlu0 5
    %654 = vperm.xlu0 %653, %v33
    %v655 = vpop.permute.xlu0 %654
    %657 = vset.pattern.permute.xlu0 5
    %658 = vperm.xlu0 %657, %v34
    %v659 = vpop.permute.xlu0 %658
    %661 = vset.pattern.permute.xlu0 5
    %662 = vperm.xlu0 %661, %v35
    %v663 = vpop.permute.xlu0 %662
    %665 = vset.pattern.permute.xlu0 5
    %666 = vperm.xlu0 %665, %v36
    %v667 = vpop.permute.xlu0 %666
    %v670 = vsel %vm180, %v649, 0
    %v673 = vsel %vm180, %v650, 0
    %v676 = vsel %vm180, %v651, 0
    %v679 = vsel %vm180, %v652, 0
    %681 = vmatprep.subr.mxu0 0.0
    %682 = vmatpush1.msra.mxu0 %v644
    %683 = vmatprep.subr.mxu0 0.0
    %684 = vmatpush1.msra.mxu0 %v645
    %685 = vmatprep.subr.mxu0 0.0
    %686 = vmatpush1.msra.mxu0 %v646
    %687 = vmatprep.subr.mxu0 0.0
    %688 = vmatpush1.msra.mxu0 %v647
    %689 = vmatprep.subr.mxu0 0.0
    %690 = vmatpush1.msra.mxu0 0.0
    %691 = vmatprep.subr.mxu0 0.0
    %692 = vmatpush1.msra.mxu0 0.0
    %693 = vmatprep.subr.mxu0 0.0
    %694 = vmatpush1.msra.mxu0 0.0
    %695 = vmatprep.subr.mxu0 0.0
    %696 = vmatpush1.msra.mxu0 0.0
    %697 = vmatprep.subr.mxu0 0.0
    %698 = vmatpush1.msra.mxu0 0.0
    %699 = vmatprep.subr.mxu0 0.0
    %700 = vmatpush1.msra.mxu0 0.0
    %701 = vmatprep.subr.mxu0 0.0
    %702 = vmatpush1.msra.mxu0 0.0
    %703 = vmatprep.subr.mxu0 0.0
    %704 = vmatpush1.msra.mxu0 0.0
    %705 = vmatprep.subr.mxu0 0.0
    %706 = vmatpush1.msra.mxu0 0.0
    %707 = vmatprep.subr.mxu0 0.0
    %708 = vmatpush1.msra.mxu0 0.0
    %709 = vmatprep.subr.mxu0 0.0
    %710 = vmatpush1.msra.mxu0 0.0
    %711 = vmatprep.subr.mxu0 0.0
    %712 = vmatpush1.msra.mxu0 0.0
    %713 = vmatprep.subr.mxu0 0.0
    %714 = vmatpush1.msra.mxu0 0.0
    %715 = vmatprep.subr.mxu0 0.0
    %716 = vmatpush1.msra.mxu0 0.0
    %717 = vmatprep.subr.mxu0 0.0
    %718 = vmatpush1.msra.mxu0 0.0
    %719 = vmatprep.subr.mxu0 0.0
    %720 = vmatpush1.msra.mxu0 0.0
    %721 = vmatprep.subr.mxu0 0.0
    %722 = vmatpush1.msra.mxu0 0.0
    %723 = vmatprep.subr.mxu0 0.0
    %724 = vmatpush1.msra.mxu0 0.0
    %725 = vmatprep.subr.mxu0 0.0
    %726 = vmatpush1.msra.mxu0 0.0
    %727 = vmatprep.subr.mxu0 0.0
    %728 = vmatpush1.msra.mxu0 0.0
    %729 = vmatprep.subr.mxu0 0.0
    %730 = vmatpush1.msra.mxu0 0.0
    %731 = vmatprep.subr.mxu0 0.0
    %732 = vmatpush1.msra.mxu0 0.0
    %733 = vmatprep.subr.mxu0 0.0
    %734 = vmatpush1.msra.mxu0 0.0
    %735 = vmatprep.subr.mxu0 0.0
    %736 = vmatpush1.msra.mxu0 0.0
    %737 = vmatprep.subr.mxu0 0.0
    %738 = vmatpush1.msra.mxu0 0.0
    %739 = vmatprep.subr.mxu0 0.0
    %740 = vmatpush1.msra.mxu0 0.0
    %741 = vmatprep.subr.mxu0 0.0
    %742 = vmatpush1.msra.mxu0 0.0
    %743 = vmatprep.subr.mxu0 0.0
    %744 = vmatpush1.msra.mxu0 0.0
    %745 = vmatprep.mubr.f32.mxu0 0.0
    %746 = vmatmul.mubr.f32.gmra.mrb[0].mxu0 %v670
    %v747 = vpop.f32.mrb[0].mxu0
    %v748 = vadd.f32 %v655, %v747
    %v749 = vpop.f32.mrb[0].mxu0
    %750 = vmatprep.mubr.f32.mxu0 0.0
    %751 = vmatmul.mubr.f32.gmra.mrb[0].mxu0 %v673
    %v752 = vpop.f32.mrb[0].mxu0
    %v753 = vadd.f32 %v659, %v752
    %v754 = vpop.f32.mrb[0].mxu0
    %755 = vmatprep.mubr.f32.mxu0 0.0
    %756 = vmatmul.mubr.f32.gmra.mrb[0].mxu0 %v676
    %v757 = vpop.f32.mrb[0].mxu0
    %v758 = vadd.f32 %v663, %v757
    %v759 = vpop.f32.mrb[0].mxu0
    %760 = vmatprep.mubr.f32.mxu0 0.0
    %761 = vmatmul.mubr.f32.gmra.mrb[0].mxu0 %v679
    %v762 = vpop.f32.mrb[0].mxu0
    %v763 = vadd.f32 %v667, %v762
    %v764 = vpop.f32.mrb[0].mxu0
    %765 = vdwg.mxu0
    %v766 = vmax.f32 %v748, 0.0
    %v767 = vmax.f32 %v753, 0.0
    %v768 = vmax.f32 %v758, 0.0
    %v769 = vmax.f32 %v763, 0.0
    %s770 = scalar_lea.vmem [#allocation2], 192
    %v771 = vld [vmem:[%s770] sm:$0xff]
    %v772 = vld [vmem:[%s770 + $0x8] sm:$0xff]
    %v773 = vld [vmem:[%s770 + $0x10] sm:$0xff]
    %v774 = vld [vmem:[%s770 + $0x18] sm:$0xff]
    %775 = vset.pattern.permute.xlu0 6
    %776 = vperm.xlu0 %775, %v33
    %v777 = vpop.permute.xlu0 %776
    %779 = vset.pattern.permute.xlu0 6
    %780 = vperm.xlu0 %779, %v34
    %v781 = vpop.permute.xlu0 %780
    %782 = vset.pattern.permute.xlu0 6
    %783 = vperm.xlu0 %782, %v35
    %v784 = vpop.permute.xlu0 %783
    %785 = vset.pattern.permute.xlu0 6
    %786 = vperm.xlu0 %785, %v36
    %v787 = vpop.permute.xlu0 %786
    %v789 = vsel %vm180, %v771, 0
    %v792 = vsel %vm180, %v772, 0
    %v795 = vsel %vm180, %v773, 0
    %v798 = vsel %vm180, %v774, 0
    %800 = vmatprep.subr.mxu0 0.0
    %801 = vmatpush1.msra.mxu0 %v766
    %802 = vmatprep.subr.mxu0 0.0
    %803 = vmatpush1.msra.mxu0 %v767
    %804 = vmatprep.subr.mxu0 0.0
    %805 = vmatpush1.msra.mxu0 %v768
    %806 = vmatprep.subr.mxu0 0.0
    %807 = vmatpush1.msra.mxu0 %v769
    %808 = vmatprep.subr.mxu0 0.0
    %809 = vmatpush1.msra.mxu0 0.0
    %810 = vmatprep.subr.mxu0 0.0
    %811 = vmatpush1.msra.mxu0 0.0
    %812 = vmatprep.subr.mxu0 0.0
    %813 = vmatpush1.msra.mxu0 0.0
    %814 = vmatprep.subr.mxu0 0.0
    %815 = vmatpush1.msra.mxu0 0.0
    %816 = vmatprep.subr.mxu0 0.0
    %817 = vmatpush1.msra.mxu0 0.0
    %818 = vmatprep.subr.mxu0 0.0
    %819 = vmatpush1.msra.mxu0 0.0
    %820 = vmatprep.subr.mxu0 0.0
    %821 = vmatpush1.msra.mxu0 0.0
    %822 = vmatprep.subr.mxu0 0.0
    %823 = vmatpush1.msra.mxu0 0.0
    %824 = vmatprep.subr.mxu0 0.0
    %825 = vmatpush1.msra.mxu0 0.0
    %826 = vmatprep.subr.mxu0 0.0
    %827 = vmatpush1.msra.mxu0 0.0
    %828 = vmatprep.subr.mxu0 0.0
    %829 = vmatpush1.msra.mxu0 0.0
    %830 = vmatprep.subr.mxu0 0.0
    %831 = vmatpush1.msra.mxu0 0.0
    %832 = vmatprep.subr.mxu0 0.0
    %833 = vmatpush1.msra.mxu0 0.0
    %834 = vmatprep.subr.mxu0 0.0
    %835 = vmatpush1.msra.mxu0 0.0
    %836 = vmatprep.subr.mxu0 0.0
    %837 = vmatpush1.msra.mxu0 0.0
    %838 = vmatprep.subr.mxu0 0.0
    %839 = vmatpush1.msra.mxu0 0.0
    %840 = vmatprep.subr.mxu0 0.0
    %841 = vmatpush1.msra.mxu0 0.0
    %842 = vmatprep.subr.mxu0 0.0
    %843 = vmatpush1.msra.mxu0 0.0
    %844 = vmatprep.subr.mxu0 0.0
    %845 = vmatpush1.msra.mxu0 0.0
    %846 = vmatprep.subr.mxu0 0.0
    %847 = vmatpush1.msra.mxu0 0.0
    %848 = vmatprep.subr.mxu0 0.0
    %849 = vmatpush1.msra.mxu0 0.0
    %850 = vmatprep.subr.mxu0 0.0
    %851 = vmatpush1.msra.mxu0 0.0
    %852 = vmatprep.subr.mxu0 0.0
    %853 = vmatpush1.msra.mxu0 0.0
    %854 = vmatprep.subr.mxu0 0.0
    %855 = vmatpush1.msra.mxu0 0.0
    %856 = vmatprep.subr.mxu0 0.0
    %857 = vmatpush1.msra.mxu0 0.0
    %858 = vmatprep.subr.mxu0 0.0
    %859 = vmatpush1.msra.mxu0 0.0
    %860 = vmatprep.subr.mxu0 0.0
    %861 = vmatpush1.msra.mxu0 0.0
    %862 = vmatprep.subr.mxu0 0.0
    %863 = vmatpush1.msra.mxu0 0.0
    %864 = vmatprep.mubr.f32.mxu0 0.0
    %865 = vmatmul.mubr.f32.gmra.mrb[0].mxu0 %v789
    %v866 = vpop.f32.mrb[0].mxu0
    %v867 = vadd.f32 %v777, %v866
    %v868 = vpop.f32.mrb[0].mxu0
    %869 = vmatprep.mubr.f32.mxu0 0.0
    %870 = vmatmul.mubr.f32.gmra.mrb[0].mxu0 %v792
    %v871 = vpop.f32.mrb[0].mxu0
    %v872 = vpop.f32.mrb[0].mxu0
    %873 = vmatprep.mubr.f32.mxu0 0.0
    %874 = vmatmul.mubr.f32.gmra.mrb[0].mxu0 %v795
    %v875 = vpop.f32.mrb[0].mxu0
    %v876 = vpop.f32.mrb[0].mxu0
    %877 = vmatprep.mubr.f32.mxu0 0.0
    %878 = vmatmul.mubr.f32.gmra.mrb[0].mxu0 %v798
    %v879 = vpop.f32.mrb[0].mxu0
    %v880 = vpop.f32.mrb[0].mxu0
    %881 = vdwg.mxu0
    %v882 = vld [vmem:[%s0 + $0x3] sm:$0x1]
    %vm883 = vcmp.gt.f32.partialorder %v882, 0.5
    %v884 = vsel %vm883, -1e+09, %v867
    %885 = vst [vmem:[%s3] sm:$0x1] %v884
    %886 = vst [vmem:[%s3] sm:$0x2] %v867
    // Predicated region
    $region18: #{simple_ppo_policy.1} parent=1 // pred_check
      _
    $region19: #{simple_ppo_policy.1} parent=1 // pred_check_branch
      %888 = sbr.rel (0) target = $region21
    $region20: #{simple_ppo_policy.1} parent=1 // pred_region
      _
    $region21: #{simple_ppo_policy.1} parent=1 // pred_fallthru
      _
    // Predicated region
    $region22: #{simple_ppo_policy.1} parent=1 // pred_check
      _
    $region23: #{simple_ppo_policy.1} parent=1 // pred_check_branch
      %890 = sbr.rel (0) target = $region25
    $region24: #{simple_ppo_policy.1} parent=1 // pred_region
      _
    $region25: #{simple_ppo_policy.1} parent=1 // pred_fallthru
      _
    %891 = vsyncpa [#allocation3], 1

</llo_original>
